<compile_context>
chip_gen: v7x
topology: tpu7x:2x2x1
jax: 0.10.0
libtpu: 0.0.40
codegen_flags: <defaults>
</compile_context>

<pallas_src>
import jax
import jax.numpy as jnp
from jax import lax
from jax.experimental import pallas as pl
from jax.experimental.pallas import tpu as pltpu

_NEG = -1e30  # bias pad value for logits lanes >= output_size


def _gates_fc_logsoftmax(gates, c, wfc, bfc, out_dtype):
    """Shared LSTM-cell tail: gate nonlinearities, state update, FC, log-softmax.

    `gates` is the full (B, 4H) pre-activation block; sigmoid/tanh are pushed
    once on the whole block (EUP cost is per-vreg), then lane-sliced.
    """
    H = c.shape[1]
    sig = jax.nn.sigmoid(gates)          # one EUP push for the whole block
    th = jnp.tanh(gates)                 # one EUP push for the whole block
    # PyTorch gate order [i, f, g, o].
    i_g = sig[:, 0 * H:1 * H]
    f_g = sig[:, 1 * H:2 * H]
    g_g = th[:, 2 * H:3 * H]
    o_g = sig[:, 3 * H:4 * H]

    c_new = f_g * c + i_g * g_g
    h_new = o_g * jnp.tanh(c_new)

    # Dropout(0.05) == identity in eval mode.
    # FC: output padded to a full 128-lane tile; pad lanes carry bias=-1e30 so
    # they contribute nothing to max/sum of the stable log-softmax.
    logits = jnp.dot(h_new, wfc, preferred_element_type=jnp.float32) + bfc
    m = jnp.max(logits, axis=1, keepdims=True)
    shifted = logits - m
    log_probs = shifted - jnp.log(jnp.sum(jnp.exp(shifted), axis=1, keepdims=True))
    return log_probs.astype(out_dtype), h_new, c_new


# ---------------------------------------------------------------------------
# Single-step kernel (exact module forward semantics).
# ---------------------------------------------------------------------------
def teslstm_step_kernel(xh_ref, c_ref, w_ref, b_ref, wfc_ref, bfc_ref,
                        out_ref, h_out_ref, c_out_ref):
    # Fused gate matmul: [x | h] (B, IN+H) @ [W_ih^T ; W_hh^T] (IN+H, 4H).
    # Biases are pre-broadcast to (B, 4H) / (B, O_pad) at init time.
    gates = (jnp.dot(xh_ref[...], w_ref[...], preferred_element_type=jnp.float32)
             + b_ref[...])
    log_probs, h_new, c_new = _gates_fc_logsoftmax(
        gates, c_ref[...], wfc_ref[...], bfc_ref[...], out_ref.dtype)
    out_ref[...] = log_probs
    h_out_ref[...] = h_new.astype(h_out_ref.dtype)
    c_out_ref[...] = c_new.astype(c_out_ref.dtype)


# ---------------------------------------------------------------------------
# Sequence kernel: T recurrence steps inside ONE grid-less pallas_call.
#   * prologue: hoisted input projection for all timesteps (one matmul)
#   * fori_loop(unroll=True) recurrence with h/c as loop-carried values
#   * final h/c written once after the loop
# ---------------------------------------------------------------------------
def teslstm_seq_kernel(x_ref, h0_ref, c0_ref, wih_ref, whh_ref, b_ref,
                       wfc_ref, bfc_ref,
                       out_ref, h_out_ref, c_out_ref,
                       xw_scr):
    B, H = h0_ref.shape
    T = out_ref.shape[0]

    # Prologue (off the serial chain): x-projection for ALL timesteps at once.
    # (T*B, IN) @ (IN, 4H) + bias  ->  (T*B, 4H), stored in VMEM scratch.
    xw_scr[...] = (jnp.dot(x_ref[...], wih_ref[...],
                           preferred_element_type=jnp.float32) + b_ref[...])

    # Hoist weight / bias loads out of the loop.
    whh = whh_ref[...]
    wfc = wfc_ref[...]
    bfc = bfc_ref[...]          # already (B, O_pad): no per-step broadcast

    def body(t, carry):
        h, c = carry
        row = pl.multiple_of(t * B, B)
        gates = xw_scr[pl.ds(row, B), :] + jnp.dot(
            h, whh, preferred_element_type=jnp.float32)
        log_probs, h_new, c_new = _gates_fc_logsoftmax(
            gates, c, wfc, bfc, out_ref.dtype)
        out_ref[t] = log_probs
        return h_new, c_new

    h_fin, c_fin = lax.fori_loop(0, T, body,
                                 (h0_ref[...], c0_ref[...]),
                                 unroll=True)

    # Final states written once, after the recurrence.
    h_out_ref[...] = h_fin.astype(h_out_ref.dtype)
    c_out_ref[...] = c_fin.astype(c_out_ref.dtype)


# ---------------------------------------------------------------------------
# Wrappers
# ---------------------------------------------------------------------------
def teslstm_forward(t_race, t_gender, t_char, t_hidden, t_cell, params):
    """Single-step forward matching TESLSTM.forward()."""
    H = params["hidden_size"]
    O = params["output_size"]
    O_pad = params["b_fc_b"].shape[1]
    B = t_hidden.shape[0]

    # One concatenate builds the fused [race|gender|char|hidden] matmul operand
    # (== torch.cat((race,gender,char), dim=2).view(-1, IN), then [x | h]).
    xh = jnp.concatenate(
        (t_race.reshape(B, -1), t_gender.reshape(B, -1),
         t_char.reshape(B, -1), t_hidden), axis=1)

    vmem = pl.BlockSpec(memory_space=pltpu.MemorySpace.VMEM)
    out_pad, h_new, c_new = pl.pallas_call(
        teslstm_step_kernel,
        out_shape=(
            jax.ShapeDtypeStruct((B, O_pad), jnp.float32),
            jax.ShapeDtypeStruct((B, H), jnp.float32),
            jax.ShapeDtypeStruct((B, H), jnp.float32),
        ),
        in_specs=[vmem] * 6,
        out_specs=(vmem, vmem, vmem),
    )(xh, t_cell, params["w_gates"], params["b_gates_b"],
      params["w_fc_pad"], params["b_fc_b"])
    return out_pad[:, :O], h_new, c_new


def teslstm_forward_sequence(x_seq, t_hidden, t_cell, params):
    """Run T LSTM steps in ONE grid-less kernel (weights + x_seq resident)."""
    T, B, input_size = x_seq.shape
    H = params["hidden_size"]
    O = params["output_size"]
    O_pad = params["b_fc_b"].shape[1]

    x_flat = x_seq.reshape(T * B, input_size)
    vmem = pl.BlockSpec(memory_space=pltpu.MemorySpace.VMEM)

    out_pad, h_new, c_new = pl.pallas_call(
        teslstm_seq_kernel,
        out_shape=(
            jax.ShapeDtypeStruct((T, B, O_pad), jnp.float32),
            jax.ShapeDtypeStruct((B, H), jnp.float32),
            jax.ShapeDtypeStruct((B, H), jnp.float32),
        ),
        in_specs=[vmem] * 8,
        out_specs=(vmem, vmem, vmem),
        scratch_shapes=[pltpu.VMEM((T * B, 4 * H), jnp.float32)],
    )(x_flat, t_hidden, t_cell,
      params["w_ih_t"], params["w_hh_t"], params["b_gates"],
      params["w_fc_pad"], params["b_fc_b"])
    return out_pad[:, :, :O], h_new, c_new


# ---------------------------------------------------------------------------
# Parameters (PyTorch-style init) + one-time kernel-ready packing.
# ---------------------------------------------------------------------------
def init_params(key, input_size, hidden_size, output_size, batch_size):
    ks = jax.random.split(key, 6)
    k_lstm = 1.0 / jnp.sqrt(hidden_size)
    k_fc = 1.0 / jnp.sqrt(hidden_size)
    u = lambda k, shape, bound: jax.random.uniform(
        k, shape, dtype=jnp.float32, minval=-bound, maxval=bound)

    weight_ih = u(ks[0], (4 * hidden_size, input_size), k_lstm)
    weight_hh = u(ks[1], (4 * hidden_size, hidden_size), k_lstm)
    bias_ih = u(ks[2], (4 * hidden_size,), k_lstm)
    bias_hh = u(ks[3], (4 * hidden_size,), k_lstm)
    fc_weight = u(ks[4], (output_size, hidden_size), k_fc)
    fc_bias = u(ks[5], (output_size,), k_fc)

    o_pad = max(128, ((output_size + 127) // 128) * 128)

    # Kernel-ready operands computed ONCE (no per-call transposes/adds, no
    # per-step broadcasts).
    w_ih_t = weight_ih.T                                    # (IN, 4H)
    w_hh_t = weight_hh.T                                    # (H, 4H)
    w_gates = jnp.concatenate((w_ih_t, w_hh_t), axis=0)     # (IN+H, 4H)
    b_gates = (bias_ih + bias_hh).reshape(1, 4 * hidden_size)
    b_gates_b = jnp.broadcast_to(b_gates, (batch_size, 4 * hidden_size))
    w_fc_pad = jnp.pad(fc_weight.T, ((0, 0), (0, o_pad - output_size)))
    b_fc_pad = jnp.pad(fc_bias.reshape(1, output_size),
                       ((0, 0), (0, o_pad - output_size)),
                       constant_values=_NEG)
    b_fc_b = jnp.broadcast_to(b_fc_pad, (batch_size, o_pad))

    return {
        "input_size": input_size,
        "hidden_size": hidden_size,
        "output_size": output_size,
        # raw PyTorch-layout parameters (used by the reference check)
        "weight_ih": weight_ih, "weight_hh": weight_hh,
        "bias_ih": bias_ih, "bias_hh": bias_hh,
        "fc_weight": fc_weight, "fc_bias": fc_bias,
        # precomputed kernel operands
        "w_ih_t": w_ih_t, "w_hh_t": w_hh_t,
        "w_gates": w_gates,
        "b_gates": b_gates, "b_gates_b": b_gates_b,
        "w_fc_pad": w_fc_pad, "b_fc_b": b_fc_b,
    }


# ---------------------------------------------------------------------------
# Pure-JAX references.
# ---------------------------------------------------------------------------
def _reference_step(x, h, c, params):
    H = params["hidden_size"]
    gates = (x @ params["weight_ih"].T + params["bias_ih"]
             + h @ params["weight_hh"].T + params["bias_hh"])
    i_g = jax.nn.sigmoid(gates[:, 0 * H:1 * H])
    f_g = jax.nn.sigmoid(gates[:, 1 * H:2 * H])
    g_g = jnp.tanh(gates[:, 2 * H:3 * H])
    o_g = jax.nn.sigmoid(gates[:, 3 * H:4 * H])
    c_new = f_g * c + i_g * g_g
    h_new = o_g * jnp.tanh(c_new)
    logits = h_new @ params["fc_weight"].T + params["fc_bias"]
    return jax.nn.log_softmax(logits, axis=1), h_new, c_new


def _reference(t_race, t_gender, t_char, h, c, params):
    x = jnp.concatenate((t_race, t_gender, t_char), axis=2).reshape(
        -1, params["input_size"])
    return _reference_step(x, h, c, params)


def _reference_sequence(x_seq, h, c, params):
    def body(carry, x):
        h, c = carry
        out, h, c = _reference_step(x, h, c, params)
        return (h, c), out
    (h, c), outs = lax.scan(body, (h, c), x_seq)
    return outs, h, c


if __name__ == "__main__":
    import numpy as np

    # race(4) + gender(2) + char(26) = 32
    RACE, GENDER, CHAR = 4, 2, 26
    INPUT_SIZE = RACE + GENDER + CHAR
    HIDDEN = 32
    OUTPUT = 26
    BATCH = 8
    SEQ = 8

    key = jax.random.PRNGKey(0)
    kp, k1, k2, k3, k4, k5 = jax.random.split(key, 6)

    params = init_params(kp, INPUT_SIZE, HIDDEN, OUTPUT, BATCH)

    t_race = jax.random.normal(k1, (BATCH, 1, RACE), dtype=jnp.float32)
    t_gender = jax.random.normal(k2, (BATCH, 1, GENDER), dtype=jnp.float32)
    t_char = jax.random.normal(k3, (BATCH, 1, CHAR), dtype=jnp.float32)
    t_hidden = jax.random.normal(k4, (BATCH, HIDDEN), dtype=jnp.float32)
    t_cell = jnp.zeros((BATCH, HIDDEN), dtype=jnp.float32)

    # ---- single-step forward (module semantics) ----
    out, h_new, c_new = teslstm_forward(
        t_race, t_gender, t_char, t_hidden, t_cell, params)
    jax.block_until_ready((out, h_new, c_new))

    ref_out, ref_h, ref_c = _reference(
        t_race, t_gender, t_char, t_hidden, t_cell, params)
    np.testing.assert_allclose(np.asarray(out), np.asarray(ref_out),
                               rtol=1e-5, atol=1e-4)
    np.testing.assert_allclose(np.asarray(h_new), np.asarray(ref_h),
                               rtol=1e-5, atol=1e-4)
    np.testing.assert_allclose(np.asarray(c_new), np.asarray(ref_c),
                               rtol=1e-5, atol=1e-4)

    # ---- sequence forward: SEQ steps in ONE grid-less kernel launch ----
    x_seq = jax.random.normal(k5, (SEQ, BATCH, INPUT_SIZE), dtype=jnp.float32)
    out_s, h_s, c_s = teslstm_forward_sequence(x_seq, t_hidden, t_cell, params)
    jax.block_until_ready((out_s, h_s, c_s))

    ref_out_s, ref_h_s, ref_c_s = _reference_sequence(
        x_seq, t_hidden, t_cell, params)
    np.testing.assert_allclose(np.asarray(out_s), np.asarray(ref_out_s),
                               rtol=1e-5, atol=1e-4)
    np.testing.assert_allclose(np.asarray(h_s), np.asarray(ref_h_s),
                               rtol=1e-5, atol=1e-4)
    np.testing.assert_allclose(np.asarray(c_s), np.asarray(ref_c_s),
                               rtol=1e-5, atol=1e-4)

    print("KERNEL_OK")
</pallas_src>

<mosaic_0001>
module attributes {stable_mosaic.version = 11 : i64} {
  func.func @teslstm_step_kernel(%arg0: memref<8x64xf32, #tpu.memory_space<vmem>>, %arg1: memref<8x32xf32, #tpu.memory_space<vmem>>, %arg2: memref<64x128xf32, #tpu.memory_space<vmem>>, %arg3: memref<8x128xf32, #tpu.memory_space<vmem>>, %arg4: memref<32x128xf32, #tpu.memory_space<vmem>>, %arg5: memref<8x128xf32, #tpu.memory_space<vmem>>, %arg6: memref<8x128xf32, #tpu.memory_space<vmem>>, %arg7: memref<8x32xf32, #tpu.memory_space<vmem>>, %arg8: memref<8x32xf32, #tpu.memory_space<vmem>>) attributes {dimension_semantics = [], scalar_prefetch = 0 : i64, scratch_operands = 0 : i64, tpu.core_type = #tpu.core_type<tc>} {
    %c0 = arith.constant 0 : index
    %c0_0 = arith.constant 0 : index
    %0 = vector.load %arg0[%c0, %c0_0] : memref<8x64xf32, #tpu.memory_space<vmem>>, vector<8x64xf32>
    %c0_1 = arith.constant 0 : index
    %c0_2 = arith.constant 0 : index
    %1 = vector.load %arg2[%c0_1, %c0_2] : memref<64x128xf32, #tpu.memory_space<vmem>>, vector<64x128xf32>
    %cst = arith.constant dense<0.000000e+00> : vector<8x128xf32>
    %2 = tpu.matmul %0, %1, %cst {dimension_numbers = #tpu.dot_dimension_numbers<[1], [0], [0], [1], [0, 0, 1, 1], [], []>} : vector<8x64xf32>, vector<64x128xf32>, vector<8x128xf32> -> vector<8x128xf32>
    %c0_3 = arith.constant 0 : index
    %c0_4 = arith.constant 0 : index
    %3 = vector.load %arg3[%c0_3, %c0_4] : memref<8x128xf32, #tpu.memory_space<vmem>>, vector<8x128xf32>
    %4 = arith.addf %2, %3 : vector<8x128xf32>
    %c0_5 = arith.constant 0 : index
    %c0_6 = arith.constant 0 : index
    %5 = vector.load %arg1[%c0_5, %c0_6] : memref<8x32xf32, #tpu.memory_space<vmem>>, vector<8x32xf32>
    %c0_7 = arith.constant 0 : index
    %c0_8 = arith.constant 0 : index
    %6 = vector.load %arg4[%c0_7, %c0_8] : memref<32x128xf32, #tpu.memory_space<vmem>>, vector<32x128xf32>
    %c0_9 = arith.constant 0 : index
    %c0_10 = arith.constant 0 : index
    %7 = vector.load %arg5[%c0_9, %c0_10] : memref<8x128xf32, #tpu.memory_space<vmem>>, vector<8x128xf32>
    %8 = arith.negf %4 : vector<8x128xf32>
    %9 = math.exp %8 : vector<8x128xf32>
    %cst_11 = arith.constant 1.000000e+00 : f32
    %10 = vector.broadcast %cst_11 : f32 to vector<8x128xf32>
    %11 = arith.addf %10, %9 : vector<8x128xf32>
    %12 = arith.divf %10, %11 : vector<8x128xf32>
    %13 = math.tanh %4 : vector<8x128xf32>
    %14 = vector.extract_strided_slice %12 {offsets = [0, 0], sizes = [8, 32], strides = [1, 1]} : vector<8x128xf32> to vector<8x32xf32>
    %15 = vector.extract_strided_slice %12 {offsets = [0, 32], sizes = [8, 32], strides = [1, 1]} : vector<8x128xf32> to vector<8x32xf32>
    %16 = vector.extract_strided_slice %13 {offsets = [0, 64], sizes = [8, 32], strides = [1, 1]} : vector<8x128xf32> to vector<8x32xf32>
    %17 = vector.extract_strided_slice %12 {offsets = [0, 96], sizes = [8, 32], strides = [1, 1]} : vector<8x128xf32> to vector<8x32xf32>
    %18 = arith.mulf %15, %5 : vector<8x32xf32>
    %19 = arith.mulf %14, %16 : vector<8x32xf32>
    %20 = arith.addf %18, %19 : vector<8x32xf32>
    %21 = math.tanh %20 : vector<8x32xf32>
    %22 = arith.mulf %17, %21 : vector<8x32xf32>
    %cst_12 = arith.constant dense<0.000000e+00> : vector<8x128xf32>
    %23 = tpu.matmul %22, %6, %cst_12 {dimension_numbers = #tpu.dot_dimension_numbers<[1], [0], [0], [1], [0, 0, 1, 1], [], []>} : vector<8x32xf32>, vector<32x128xf32>, vector<8x128xf32> -> vector<8x128xf32>
    %24 = arith.addf %23, %7 : vector<8x128xf32>
    %cst_13 = arith.constant dense<0xFF800000> : vector<8xf32>
    %25 = vector.multi_reduction <maximumf>, %24, %cst_13 [1] : vector<8x128xf32> to vector<8xf32>
    %26 = vector.shape_cast %25 : vector<8xf32> to vector<8x1xf32>
    %27 = vector.broadcast %26 : vector<8x1xf32> to vector<8x128xf32>
    %28 = arith.subf %24, %27 : vector<8x128xf32>
    %29 = math.exp %28 : vector<8x128xf32>
    %cst_14 = arith.constant dense<0.000000e+00> : vector<8xf32>
    %30 = vector.multi_reduction <add>, %29, %cst_14 [1] : vector<8x128xf32> to vector<8xf32>
    %31 = vector.shape_cast %30 : vector<8xf32> to vector<8x1xf32>
    %32 = math.log %31 : vector<8x1xf32>
    %33 = vector.broadcast %32 : vector<8x1xf32> to vector<8x128xf32>
    %34 = arith.subf %28, %33 : vector<8x128xf32>
    %c0_15 = arith.constant 0 : index
    %c0_16 = arith.constant 0 : index
    %35 = vector.load %arg6[%c0_15, %c0_16] : memref<8x128xf32, #tpu.memory_space<vmem>>, vector<8x128xf32>
    tpu.vector_store %arg6[%c0_15, %c0_16], %34 {strides = array<i32>} : memref<8x128xf32, #tpu.memory_space<vmem>>, vector<8x128xf32>,
    %c0_17 = arith.constant 0 : index
    %c0_18 = arith.constant 0 : index
    %36 = vector.load %arg7[%c0_17, %c0_18] : memref<8x32xf32, #tpu.memory_space<vmem>>, vector<8x32xf32>
    tpu.vector_store %arg7[%c0_17, %c0_18], %22 {strides = array<i32>} : memref<8x32xf32, #tpu.memory_space<vmem>>, vector<8x32xf32>,
    %c0_19 = arith.constant 0 : index
    %c0_20 = arith.constant 0 : index
    %37 = vector.load %arg8[%c0_19, %c0_20] : memref<8x32xf32, #tpu.memory_space<vmem>>, vector<8x32xf32>
    tpu.vector_store %arg8[%c0_19, %c0_20], %20 {strides = array<i32>} : memref<8x32xf32, #tpu.memory_space<vmem>>, vector<8x32xf32>,
    return
  }
}

</mosaic_0001>

<llo_original>
// kernel: tpu_custom_call.1
$region0: #{tpu_custom_call.1}
  #allocation0 [shape = 'u32[]', space=smem, size = 0x4, offset = 0x4, fixed_abs, tag = 'smem constant byte address 0x4 - core index']
  #allocation1 [shape = 'u32[144,128]{1,0:T(1,128)}', space=vmem, size = 0x12000, scoped, tag = 'internal scratch']
  %s0 = inlined_call_operand.hbm [shape: f32[8,64], index: 0, kind: input, shape index: {}]
  %s1 = inlined_call_operand.hbm [shape: f32[8,32], index: 1, kind: input, shape index: {}]
  %s2 = inlined_call_operand.hbm [shape: f32[64,128], index: 2, kind: input, shape index: {}]
  %s3 = inlined_call_operand.vmem [shape: f32[8,128], index: 3, kind: input, shape index: {}]
  %s4 = inlined_call_operand.hbm [shape: f32[32,128], index: 4, kind: input, shape index: {}]
  %s5 = inlined_call_operand.vmem [shape: f32[8,128], index: 5, kind: input, shape index: {}]
  %s6 = inlined_call_operand.hbm [shape: f32[8,128], index: 6, kind: output, shape index: {0}]
  %s7 = inlined_call_operand.hbm [shape: f32[8,32], index: 7, kind: output, shape index: {1}]
  %s8 = inlined_call_operand.hbm [shape: f32[8,32], index: 8, kind: output, shape index: {2}]
  %9 = xla_tuple %s6, %s7, %s8
  %s10 = sld [smem:[#allocation0]]
  $region66: #{tpu_custom_call.1} parent=0
    _
  %s12 = ssub.s32 1, %s10
  %s13 = scalar_select 0, %s12, %s10
  $region1: #{tpu_custom_call.1} parent=0
    #allocation2 [shape = 'u8[4096]{0}', space=vmem, size = 0x1000, scoped, tag = 'input window, operand 0, single buffered']
    #allocation3 [shape = 's32[1]{0}', space=sflag, size = 0x4, scoped, tag = 'scoped memory for tpu_custom_call.1']
    #allocation4 [shape = 's32[1]{0}', space=sflag, size = 0x4, scoped, tag = 'scoped memory for tpu_custom_call.1']
    #allocation5 [shape = 'u8[4096]{0}', space=vmem, size = 0x1000, scoped, tag = 'input window, operand 1, single buffered']
    #allocation6 [shape = 's32[1]{0}', space=sflag, size = 0x4, scoped, tag = 'scoped memory for tpu_custom_call.1']
    #allocation7 [shape = 'u8[32768]{0}', space=vmem, size = 0x8000, scoped, tag = 'input window, operand 2, single buffered']
    #allocation8 [shape = 'u8[16384]{0}', space=vmem, size = 0x4000, scoped, tag = 'input window, operand 4, single buffered']
    #allocation9 [shape = 's32[1]{0}', space=sflag, size = 0x4, scoped, tag = 'scoped memory for tpu_custom_call.1']
    #allocation10 [shape = 'u8[4096]{0}', space=vmem, size = 0x1000, scoped, tag = 'output window, operand 0, single buffered']
    #allocation11 [shape = 'u8[4096]{0}', space=vmem, size = 0x1000, scoped, tag = 'output window, operand 1, single buffered']
    #allocation12 [shape = 's32[1]{0}', space=sflag, size = 0x4, scoped, tag = 'scoped memory for tpu_custom_call.1']
    #allocation13 [shape = 'u8[4096]{0}', space=vmem, size = 0x1000, scoped, tag = 'output window, operand 2, single buffered']
    %14 = vsyncpa [#allocation3], 0
    %15 = vsyncpa [#allocation6], 0
    %16 = vsyncpa [#allocation9], 0
    %17 = vsyncpa [#allocation4], 0
    %18 = vsyncpa [#allocation12], 0
    // Predicated region
    $region2: #{tpu_custom_call.1} parent=1 // pred_check
      _
    $region3: #{tpu_custom_call.1} parent=1 // pred_check_branch
      %20 = sbr.rel (0) target = $region5
    $region4: #{tpu_custom_call.1} parent=1 // pred_region
      %s22 = ssub.s32 128, 128
      %23 = vsyncadd [#allocation3], %s22
      %s25 = sshll.u32 [#allocation2], 4
      %s26 = int_to_ptr.vmem [resolvable:$true] %s25
      %28 = dma.hbm_to_vmem [thread:$0]  %s0, 128, %s26, [#allocation3]
    $region5: #{tpu_custom_call.1} parent=1 // pred_fallthru
      _
    // Predicated region
    $region6: #{tpu_custom_call.1} parent=1 // pred_check
      _
    $region7: #{tpu_custom_call.1} parent=1 // pred_check_branch
      %30 = sbr.rel (0) target = $region9
    $region8: #{tpu_custom_call.1} parent=1 // pred_region
      %s32 = ssub.s32 128, 128
      %33 = vsyncadd [#allocation6], %s32
      %s35 = sshll.u32 [#allocation5], 4
      %s36 = int_to_ptr.vmem [resolvable:$true] %s35
      %38 = dma.hbm_to_vmem [thread:$0]  %s1, 128, %s36, [#allocation6]
    $region9: #{tpu_custom_call.1} parent=1 // pred_fallthru
      _
    // Predicated region
    $region10: #{tpu_custom_call.1} parent=1 // pred_check
      _
    $region11: #{tpu_custom_call.1} parent=1 // pred_check_branch
      %40 = sbr.rel (0) target = $region13
    $region12: #{tpu_custom_call.1} parent=1 // pred_region
      %s42 = ssub.s32 1024, 1024
      %43 = vsyncadd [#allocation6], %s42
      %s44 = sshll.u32 [#allocation7], 4
      %s45 = int_to_ptr.vmem [resolvable:$true] %s44
      %50 = dma.hbm_to_vmem [thread:$0]  %s2, 1024, %s45, [#allocation6], 128, 128, 8
    $region13: #{tpu_custom_call.1} parent=1 // pred_fallthru
      _
    // Predicated region
    $region14: #{tpu_custom_call.1} parent=1 // pred_check
      _
    $region15: #{tpu_custom_call.1} parent=1 // pred_check_branch
      %52 = sbr.rel (0) target = $region17
    $region16: #{tpu_custom_call.1} parent=1 // pred_region
      _
    $region17: #{tpu_custom_call.1} parent=1 // pred_fallthru
      _
    // Predicated region
    $region18: #{tpu_custom_call.1} parent=1 // pred_check
      _
    $region19: #{tpu_custom_call.1} parent=1 // pred_check_branch
      %54 = sbr.rel (0) target = $region21
    $region20: #{tpu_custom_call.1} parent=1 // pred_region
      %s56 = ssub.s32 512, 512
      %57 = vsyncadd [#allocation9], %s56
      %s58 = sshll.u32 [#allocation8], 4
      %s59 = int_to_ptr.vmem [resolvable:$true] %s58
      %64 = dma.hbm_to_vmem [thread:$0]  %s4, 512, %s59, [#allocation9], 128, 128, 8
    $region21: #{tpu_custom_call.1} parent=1 // pred_fallthru
      _
    // Predicated region
    $region22: #{tpu_custom_call.1} parent=1 // pred_check
      _
    $region23: #{tpu_custom_call.1} parent=1 // pred_check_branch
      %66 = sbr.rel (0) target = $region25
    $region24: #{tpu_custom_call.1} parent=1 // pred_region
      _
    $region25: #{tpu_custom_call.1} parent=1 // pred_fallthru
      _
    // Predicated region
    $region26: #{tpu_custom_call.1} parent=1 // pred_check
      _
    $region27: #{tpu_custom_call.1} parent=1 // pred_check_branch
      %68 = sbr.rel (0) target = $region29
    $region28: #{tpu_custom_call.1} parent=1 // pred_region
      %69 = dma.done [#allocation3], 128
    $region29: #{tpu_custom_call.1} parent=1 // pred_fallthru
      _
    // Predicated region
    $region30: #{tpu_custom_call.1} parent=1 // pred_check
      _
    $region31: #{tpu_custom_call.1} parent=1 // pred_check_branch
      %71 = sbr.rel (0) target = $region33
    $region32: #{tpu_custom_call.1} parent=1 // pred_region
      %72 = dma.done [#allocation6], 128
    $region33: #{tpu_custom_call.1} parent=1 // pred_fallthru
      _
    // Predicated region
    $region34: #{tpu_custom_call.1} parent=1 // pred_check
      _
    $region35: #{tpu_custom_call.1} parent=1 // pred_check_branch
      %74 = sbr.rel (0) target = $region37
    $region36: #{tpu_custom_call.1} parent=1 // pred_region
      %75 = dma.done [#allocation6], 1024
    $region37: #{tpu_custom_call.1} parent=1 // pred_fallthru
      _
    // Predicated region
    $region38: #{tpu_custom_call.1} parent=1 // pred_check
      _
    $region39: #{tpu_custom_call.1} parent=1 // pred_check_branch
      %77 = sbr.rel (0) target = $region41
    $region40: #{tpu_custom_call.1} parent=1 // pred_region
      %78 = dma.done [#allocation9], 512
    $region41: #{tpu_custom_call.1} parent=1 // pred_fallthru
      _
    %v79 = vld [vmem:[#allocation2] sm:$0xff]
    %v80 = vld [vmem:[#allocation7] sm:$0xff]
    %v81 = vld [vmem:[#allocation7 + $0x8] sm:$0xff]
    %v82 = vld [vmem:[#allocation7 + $0x10] sm:$0xff]
    %v83 = vld [vmem:[#allocation7 + $0x18] sm:$0xff]
    %v84 = vld [vmem:[#allocation7 + $0x20] sm:$0xff]
    %v85 = vld [vmem:[#allocation7 + $0x28] sm:$0xff]
    %v86 = vld [vmem:[#allocation7 + $0x30] sm:$0xff]
    %v87 = vld [vmem:[#allocation7 + $0x38] sm:$0xff]
    %v88 = vld [vmem:[%s3] sm:$0xff]
    %vm89 = vcmask 523264
    %v91 = vsel %vm89, %v79, 0
    %93 = vmatprep.subr.mxu0 0.0
    %94 = vmatpush1.msra.mxu0 %v80
    %95 = vmatprep.subr.mxu0 0.0
    %96 = vmatpush1.msra.mxu0 %v81
    %97 = vmatprep.subr.mxu0 0.0
    %98 = vmatpush1.msra.mxu0 %v82
    %99 = vmatprep.subr.mxu0 0.0
    %100 = vmatpush1.msra.mxu0 %v83
    %101 = vmatprep.subr.mxu0 0.0
    %102 = vmatpush1.msra.mxu0 %v84
    %103 = vmatprep.subr.mxu0 0.0
    %104 = vmatpush1.msra.mxu0 %v85
    %105 = vmatprep.subr.mxu0 0.0
    %106 = vmatpush1.msra.mxu0 %v86
    %107 = vmatprep.subr.mxu0 0.0
    %108 = vmatpush1.msra.mxu0 %v87
    %109 = vmatprep.subr.mxu0 0.0
    %110 = vmatpush1.msra.mxu0 0.0
    %111 = vmatprep.subr.mxu0 0.0
    %112 = vmatpush1.msra.mxu0 0.0
    %113 = vmatprep.subr.mxu0 0.0
    %114 = vmatpush1.msra.mxu0 0.0
    %115 = vmatprep.subr.mxu0 0.0
    %116 = vmatpush1.msra.mxu0 0.0
    %117 = vmatprep.subr.mxu0 0.0
    %118 = vmatpush1.msra.mxu0 0.0
    %119 = vmatprep.subr.mxu0 0.0
    %120 = vmatpush1.msra.mxu0 0.0
    %121 = vmatprep.subr.mxu0 0.0
    %122 = vmatpush1.msra.mxu0 0.0
    %123 = vmatprep.subr.mxu0 0.0
    %124 = vmatpush1.msra.mxu0 0.0
    %125 = vmatprep.subr.mxu0 0.0
    %126 = vmatpush1.msra.mxu0 0.0
    %127 = vmatprep.subr.mxu0 0.0
    %128 = vmatpush1.msra.mxu0 0.0
    %129 = vmatprep.subr.mxu0 0.0
    %130 = vmatpush1.msra.mxu0 0.0
    %131 = vmatprep.subr.mxu0 0.0
    %132 = vmatpush1.msra.mxu0 0.0
    %133 = vmatprep.subr.mxu0 0.0
    %134 = vmatpush1.msra.mxu0 0.0
    %135 = vmatprep.subr.mxu0 0.0
    %136 = vmatpush1.msra.mxu0 0.0
    %137 = vmatprep.subr.mxu0 0.0
    %138 = vmatpush1.msra.mxu0 0.0
    %139 = vmatprep.subr.mxu0 0.0
    %140 = vmatpush1.msra.mxu0 0.0
    %141 = vmatprep.subr.mxu0 0.0
    %142 = vmatpush1.msra.mxu0 0.0
    %143 = vmatprep.subr.mxu0 0.0
    %144 = vmatpush1.msra.mxu0 0.0
    %145 = vmatprep.subr.mxu0 0.0
    %146 = vmatpush1.msra.mxu0 0.0
    %147 = vmatprep.subr.mxu0 0.0
    %148 = vmatpush1.msra.mxu0 0.0
    %149 = vmatprep.subr.mxu0 0.0
    %150 = vmatpush1.msra.mxu0 0.0
    %151 = vmatprep.subr.mxu0 0.0
    %152 = vmatpush1.msra.mxu0 0.0
    %153 = vmatprep.subr.mxu0 0.0
    %154 = vmatpush1.msra.mxu0 0.0
    %155 = vmatprep.subr.mxu0 0.0
    %156 = vmatpush1.msra.mxu0 0.0
    %157 = vmatprep.mubr.f32.mxu0 0.0
    %158 = vmatmul.mubr.f32.gmra.mrb[0].mxu0 %v91
    %v159 = vpop.f32.mrb[0].mxu0
    %v160 = vadd.f32 %v88, %v159
    %v161 = vpop.f32.mrb[0].mxu0
    %162 = vdwg.mxu0
    %v163 = vld [vmem:[#allocation5] sm:$0xff]
    %v164 = vld [vmem:[#allocation8] sm:$0xff]
    %v165 = vld [vmem:[#allocation8 + $0x8] sm:$0xff]
    %v166 = vld [vmem:[#allocation8 + $0x10] sm:$0xff]
    %v167 = vld [vmem:[#allocation8 + $0x18] sm:$0xff]
    %v168 = vld [vmem:[%s5] sm:$0xff]
    %v169 = vxor.u32 %v160, 2147483648
    %v170 = vmul.f32 %v169, 1.442695
    %v171 = vpow.pop %v170
    %v172 = vadd.f32 %v171, 1.0
    %v173 = vrcp.pop %v172
    %v174 = vmul.f32 1.0, %v173
    %v175 = vtanh.pop %v160
    %177 = vrot.lane.b32.xlu0 %v163, 32
    %v178 = vpop.permute.xlu0 %177
    %v180 = vmul.f32 %v174, %v178
    %182 = vrot.lane.b32.xlu0 %v175, 64
    %v183 = vpop.permute.xlu0 %182
    %v185 = vmul.f32 %v174, %v183
    %187 = vrot.lane.b32.xlu0 %v185, 32
    %v188 = vpop.permute.xlu0 %187
    %v190 = vadd.f32 %v180, %v188
    %v191 = vtanh.pop %v190
    %193 = vrot.lane.b32.xlu0 %v191, 64
    %v194 = vpop.permute.xlu0 %193
    %v196 = vmul.f32 %v174, %v194
    %198 = vrot.lane.b32.xlu0 %v196, 32
    %v199 = vpop.permute.xlu0 %198
    %vm200 = vcmask 261120
    %v201 = vsel %vm200, %v199, 0
    %203 = vmatprep.subr.mxu0 0.0
    %204 = vmatpush1.msra.mxu0 %v164
    %205 = vmatprep.subr.mxu0 0.0
    %206 = vmatpush1.msra.mxu0 %v165
    %207 = vmatprep.subr.mxu0 0.0
    %208 = vmatpush1.msra.mxu0 %v166
    %209 = vmatprep.subr.mxu0 0.0
    %210 = vmatpush1.msra.mxu0 %v167
    %211 = vmatprep.subr.mxu0 0.0
    %212 = vmatpush1.msra.mxu0 0.0
    %213 = vmatprep.subr.mxu0 0.0
    %214 = vmatpush1.msra.mxu0 0.0
    %215 = vmatprep.subr.mxu0 0.0
    %216 = vmatpush1.msra.mxu0 0.0
    %217 = vmatprep.subr.mxu0 0.0
    %218 = vmatpush1.msra.mxu0 0.0
    %219 = vmatprep.subr.mxu0 0.0
    %220 = vmatpush1.msra.mxu0 0.0
    %221 = vmatprep.subr.mxu0 0.0
    %222 = vmatpush1.msra.mxu0 0.0
    %223 = vmatprep.subr.mxu0 0.0
    %224 = vmatpush1.msra.mxu0 0.0
    %225 = vmatprep.subr.mxu0 0.0
    %226 = vmatpush1.msra.mxu0 0.0
    %227 = vmatprep.subr.mxu0 0.0
    %228 = vmatpush1.msra.mxu0 0.0
    %229 = vmatprep.subr.mxu0 0.0
    %230 = vmatpush1.msra.mxu0 0.0
    %231 = vmatprep.subr.mxu0 0.0
    %232 = vmatpush1.msra.mxu0 0.0
    %233 = vmatprep.subr.mxu0 0.0
    %234 = vmatpush1.msra.mxu0 0.0
    %235 = vmatprep.subr.mxu0 0.0
    %236 = vmatpush1.msra.mxu0 0.0
    %237 = vmatprep.subr.mxu0 0.0
    %238 = vmatpush1.msra.mxu0 0.0
    %239 = vmatprep.subr.mxu0 0.0
    %240 = vmatpush1.msra.mxu0 0.0
    %241 = vmatprep.subr.mxu0 0.0
    %242 = vmatpush1.msra.mxu0 0.0
    %243 = vmatprep.subr.mxu0 0.0
    %244 = vmatpush1.msra.mxu0 0.0
    %245 = vmatprep.subr.mxu0 0.0
    %246 = vmatpush1.msra.mxu0 0.0
    %247 = vmatprep.subr.mxu0 0.0
    %248 = vmatpush1.msra.mxu0 0.0
    %249 = vmatprep.subr.mxu0 0.0
    %250 = vmatpush1.msra.mxu0 0.0
    %251 = vmatprep.subr.mxu0 0.0
    %252 = vmatpush1.msra.mxu0 0.0
    %253 = vmatprep.subr.mxu0 0.0
    %254 = vmatpush1.msra.mxu0 0.0
    %255 = vmatprep.subr.mxu0 0.0
    %256 = vmatpush1.msra.mxu0 0.0
    %257 = vmatprep.subr.mxu0 0.0
    %258 = vmatpush1.msra.mxu0 0.0
    %259 = vmatprep.subr.mxu0 0.0
    %260 = vmatpush1.msra.mxu0 0.0
    %261 = vmatprep.subr.mxu0 0.0
    %262 = vmatpush1.msra.mxu0 0.0
    %263 = vmatprep.subr.mxu0 0.0
    %264 = vmatpush1.msra.mxu0 0.0
    %265 = vmatprep.subr.mxu0 0.0
    %266 = vmatpush1.msra.mxu0 0.0
    %267 = vmatprep.mubr.f32.mxu0 0.0
    %268 = vmatmul.mubr.f32.gmra.mrb[0].mxu0 %v201
    %v269 = vpop.f32.mrb[0].mxu0
    %v270 = vadd.f32 %v168, %v269
    %v271 = vpop.f32.mrb[0].mxu0
    %272 = vdwg.mxu0
    %273 = vmax.xlane.f32.xlu0 %v270
    %v274 = vpop.xlane.xlu0 %273
    %v275 = vsub.f32 %v270, %v274
    %v276 = vmul.f32 %v275, 1.442695
    %v277 = vpow.pop %v276
    %278 = vadd.xlane.f32.xlu0 %v277
    %v279 = vpop.xlane.xlu0 %278
    %v280 = vlog2.pop %v279
    %v281 = vmul.f32 %v280, 0.6931472
    %v282 = vsub.f32 %v275, %v281
    %283 = vst [vmem:[#allocation10] sm:$0xff] %v282
    %285 = vst.msk [vmem:[#allocation11] sm:$0xff] %vm200, %v199
    %287 = vrot.lane.b32.xlu0 %v190, 96
    %v288 = vpop.permute.xlu0 %287
    %290 = vst.msk [vmem:[#allocation13] sm:$0xff] %vm200, %v288
    // Predicated region
    $region42: #{tpu_custom_call.1} parent=1 // pred_check
      _
    $region43: #{tpu_custom_call.1} parent=1 // pred_check_branch
      %292 = sbr.rel (0) target = $region45
    $region44: #{tpu_custom_call.1} parent=1 // pred_region
      %s294 = ssub.s32 128, 128
      %295 = vsyncadd [#allocation4], %s294
      %s297 = sshll.u32 [#allocation10], 4
      %s298 = int_to_ptr.vmem [resolvable:$true] %s297
      %300 = dma.vmem_to_hbm [thread:$0]  %s298, 128, %s6, [#allocation4]
    $region45: #{tpu_custom_call.1} parent=1 // pred_fallthru
      _
    // Predicated region
    $region46: #{tpu_custom_call.1} parent=1 // pred_check
      _
    $region47: #{tpu_custom_call.1} parent=1 // pred_check_branch
      %302 = sbr.rel (0) target = $region49
    $region48: #{tpu_custom_call.1} parent=1 // pred_region
      %s304 = ssub.s32 128, 128
      %305 = vsyncadd [#allocation12], %s304
      %s307 = sshll.u32 [#allocation11], 4
      %s308 = int_to_ptr.vmem [resolvable:$true] %s307
      %310 = dma.vmem_to_hbm [thread:$0]  %s308, 128, %s7, [#allocation12]
    $region49: #{tpu_custom_call.1} parent=1 // pred_fallthru
      _
    // Predicated region
    $region50: #{tpu_custom_call.1} parent=1 // pred_check
      _
    $region51: #{tpu_custom_call.1} parent=1 // pred_check_branch
      %312 = sbr.rel (0) target = $region53
    $region52: #{tpu_custom_call.1} parent=1 // pred_region
      %s314 = ssub.s32 128, 128
      %315 = vsyncadd [#allocation12], %s314
      %s317 = sshll.u32 [#allocation13], 4
      %s318 = int_to_ptr.vmem [resolvable:$true] %s317
      %320 = dma.vmem_to_hbm [thread:$0]  %s318, 128, %s8, [#allocation12]
    $region53: #{tpu_custom_call.1} parent=1 // pred_fallthru
      _
    // Predicated region
    $region54: #{tpu_custom_call.1} parent=1 // pred_check
      _
    $region55: #{tpu_custom_call.1} parent=1 // pred_check_branch
      %322 = sbr.rel (0) target = $region57
    $region56: #{tpu_custom_call.1} parent=1 // pred_region
      %323 = dma.done [#allocation4], 128
    $region57: #{tpu_custom_call.1} parent=1 // pred_fallthru
      _
    // Predicated region
    $region58: #{tpu_custom_call.1} parent=1 // pred_check
      _
    $region59: #{tpu_custom_call.1} parent=1 // pred_check_branch
      %325 = sbr.rel (0) target = $region61
    $region60: #{tpu_custom_call.1} parent=1 // pred_region
      %326 = dma.done [#allocation12], 128
    $region61: #{tpu_custom_call.1} parent=1 // pred_fallthru
      _
    // Predicated region
    $region62: #{tpu_custom_call.1} parent=1 // pred_check
      _
    $region63: #{tpu_custom_call.1} parent=1 // pred_check_branch
      %328 = sbr.rel (0) target = $region65
    $region64: #{tpu_custom_call.1} parent=1 // pred_region
      %329 = dma.done [#allocation12], 128
    $region65: #{tpu_custom_call.1} parent=1 // pred_fallthru
      _
    %330 = vsyncpa [#allocation3], 1
    %331 = vsyncpa [#allocation6], 1
    %332 = vsyncpa [#allocation9], 1
    %333 = vsyncpa [#allocation4], 1
    %334 = vsyncpa [#allocation12], 1

</llo_original>
